<compile_context>
chip_gen: v7x
topology: tpu7x:2x2x1
jax: 0.10.0
libtpu: 0.0.40
codegen_flags: <defaults>
</compile_context>

<pallas_src>
import numpy as np
import jax
import jax.numpy as jnp
from jax.experimental import pallas as pl
from jax.experimental.pallas import tpu as pltpu


def _round_up(x, m):
    return ((x + m - 1) // m) * m


# ----------------------------- anchor helpers (glue) -------------------------

def generate_anchor_base(base_size=16, ratios=(0.5, 1, 2), anchor_scales=(8, 16, 32)):
    py = base_size / 2.0
    px = base_size / 2.0
    anchor_base = np.zeros((len(ratios) * len(anchor_scales), 4), dtype=np.float32)
    for i in range(len(ratios)):
        for j in range(len(anchor_scales)):
            h = base_size * anchor_scales[j] * np.sqrt(ratios[i])
            w = base_size * anchor_scales[j] * np.sqrt(1.0 / ratios[i])
            index = i * len(anchor_scales) + j
            anchor_base[index, 0] = py - h / 2.0
            anchor_base[index, 1] = px - w / 2.0
            anchor_base[index, 2] = py + h / 2.0
            anchor_base[index, 3] = px + w / 2.0
    return anchor_base


def enumerate_shifted_anchor(anchor_base, feat_stride, height, width):
    shift_y = np.arange(0, height * feat_stride, feat_stride)
    shift_x = np.arange(0, width * feat_stride, feat_stride)
    shift_x, shift_y = np.meshgrid(shift_x, shift_y)
    shift = np.stack(
        (shift_y.ravel(), shift_x.ravel(), shift_y.ravel(), shift_x.ravel()), axis=1)
    A = anchor_base.shape[0]
    K = shift.shape[0]
    anchor = anchor_base.reshape((1, A, 4)) + \
        shift.reshape((1, K, 4)).transpose((1, 0, 2))
    return anchor.reshape((K * A, 4)).astype(np.float32)


# --------------------------------- kernel ------------------------------------

def rpn_head_kernel(col_ref, w1_ref, b1_ref, wh_ref, bh_ref, out_ref):
    """Fused conv-as-GEMM -> bias -> ReLU -> fused-heads GEMM for one row tile.

    col_ref : (TM, 9*Cin)   bf16  im2col rows (flattened batch*spatial)
    w1_ref  : (9*Cin, Cmid) bf16  3x3 conv weight, (dy, dx, cin)-major
    b1_ref  : (1, Cmid)     f32
    wh_ref  : (Cmid, Cpad)  bf16  [loc | score | zero-pad] fused head weight
    bh_ref  : (1, Cpad)     f32
    out_ref : (TM, Cpad)    f32   lane-dense fused head output
    """
    h = jnp.dot(col_ref[...], w1_ref[...], preferred_element_type=jnp.float32)
    h = jnp.maximum(h + b1_ref[...], 0.0)          # conv bias + ReLU (f32)
    h = h.astype(wh_ref.dtype)                     # bf16 operands for the MXU
    out_ref[...] = (jnp.dot(h, wh_ref[...], preferred_element_type=jnp.float32)
                    + bh_ref[...])


# --------------------------------- wrapper -----------------------------------

@jax.jit
def _rpn_compute(x_nchw, w1, b1, wloc, bloc, wsc, bsc):
    n, cin, hh, ww = x_nchw.shape
    cmid = w1.shape[-1]
    A = wloc.shape[-1] // 4
    c_heads = 6 * A                                   # 4A loc + 2A score
    c_pad = max(128, _round_up(c_heads, 128))         # lane-dense output width

    # --- XLA-side prep (all fused under jit into a single producer pass):
    #     NCHW->NHWC transpose, bf16 cast, 1-pixel spatial pad, im2col.
    xb = jnp.transpose(x_nchw, (0, 2, 3, 1)).astype(jnp.bfloat16)
    xp = jnp.pad(xb, ((0, 0), (1, 1), (1, 1), (0, 0)))
    patches = [xp[:, dy:dy + hh, dx:dx + ww, :]
               for dy in range(3) for dx in range(3)]          # (dy, dx) major
    col = jnp.concatenate(patches, axis=-1).reshape(n * hh * ww, 9 * cin)

    m_total = n * hh * ww
    tm = min(512, _round_up(m_total, 8))              # rows per grid step
    m_pad = _round_up(m_total, tm)
    if m_pad != m_total:
        col = jnp.pad(col, ((0, m_pad - m_total), (0, 0)))

    # Conv weight flattened to match the (dy, dx, cin)-major im2col ordering.
    w1_flat = w1.reshape(9 * cin, cmid).astype(jnp.bfloat16)
    b1_f32 = b1.astype(jnp.float32)
    # Fused heads, zero-padded up to a multiple of 128 output lanes.
    w_heads = jnp.concatenate([wloc, wsc], axis=1)
    w_heads = jnp.pad(w_heads, ((0, 0), (0, c_pad - c_heads))).astype(jnp.bfloat16)
    b_heads = jnp.pad(jnp.concatenate([bloc, bsc], axis=1),
                      ((0, 0), (0, c_pad - c_heads))).astype(jnp.float32)

    grid = (m_pad // tm,)
    out = pl.pallas_call(
        rpn_head_kernel,
        out_shape=jax.ShapeDtypeStruct((m_pad, c_pad), jnp.float32),
        grid_spec=pltpu.PrefetchScalarGridSpec(
            num_scalar_prefetch=0,
            grid=grid,
            in_specs=[
                pl.BlockSpec((tm, 9 * cin), lambda i: (i, 0)),
                pl.BlockSpec((9 * cin, cmid), lambda i: (0, 0)),
                pl.BlockSpec((1, cmid), lambda i: (0, 0)),
                pl.BlockSpec((cmid, c_pad), lambda i: (0, 0)),
                pl.BlockSpec((1, c_pad), lambda i: (0, 0)),
            ],
            out_specs=pl.BlockSpec((tm, c_pad), lambda i: (i, 0)),
        ),
        compiler_params=pltpu.CompilerParams(
            dimension_semantics=("parallel",),
            vmem_limit_bytes=32 * 1024 * 1024),
    )(col, w1_flat, b1_f32, w_heads, b_heads)

    out = out[:m_total].reshape(n, hh * ww, c_pad)
    rpn_locs = out[..., :4 * A].reshape(n, hh * ww * A, 4)
    rpn_scores = out[..., 4 * A:6 * A].reshape(n, hh * ww * A, 2)
    # Canonical RegionProposalNetwork applies a softmax over the 2-class dim
    # before extracting foreground probabilities (review feedback); this only
    # affects the auxiliary rpn_fg_scores, not rpn_locs / rpn_scores.
    rpn_fg_scores = jax.nn.softmax(
        rpn_scores.reshape(n, hh, ww, A, 2), axis=-1)[..., 1].reshape(n, -1)
    return rpn_locs, rpn_scores, rpn_fg_scores


def rpn_forward(x_nchw, params, anchor_base, feat_stride, img_size, scale=1.0):
    """Returns (rpn_locs, rpn_scores, rpn_fg_scores, anchor).

    rpn_locs      : (N, H*W*A, 4)
    rpn_scores    : (N, H*W*A, 2)
    rpn_fg_scores : (N, H*W*A)
    anchor        : (H*W*A, 4)  numpy array
    """
    w1, b1, wloc, bloc, wsc, bsc = params
    n, _, hh, ww = x_nchw.shape
    rpn_locs, rpn_scores, rpn_fg_scores = _rpn_compute(
        x_nchw, w1, b1, wloc, bloc, wsc, bsc)
    anchor = enumerate_shifted_anchor(np.asarray(anchor_base), feat_stride, hh, ww)
    # TODO(synk): rois / roi_indices from ProposalCreator (NMS) are not produced.
    return rpn_locs, rpn_scores, rpn_fg_scores, anchor


# --------------------------- pure-JAX reference -------------------------------

def rpn_reference(x_nchw, params):
    """Reference replicating the same bf16-operand / f32-accumulation math."""
    w1, b1, wloc, bloc, wsc, bsc = params
    n, cin, hh, ww = x_nchw.shape
    cmid = w1.shape[-1]
    xb = jnp.transpose(x_nchw, (0, 2, 3, 1)).astype(jnp.bfloat16)
    xp = jnp.pad(xb, ((0, 0), (1, 1), (1, 1), (0, 0)))
    acc = jnp.zeros((n, hh, ww, cmid), jnp.float32)
    for dy in range(3):
        for dx in range(3):
            acc = acc + jnp.einsum(
                'nhwc,cm->nhwm', xp[:, dy:dy + hh, dx:dx + ww, :],
                w1[dy, dx].astype(jnp.bfloat16),
                preferred_element_type=jnp.float32)
    h = jnp.maximum(acc + b1.reshape(1, 1, 1, -1), 0.0).astype(jnp.bfloat16)
    locs = jnp.einsum('nhwm,mk->nhwk', h, wloc.astype(jnp.bfloat16),
                      preferred_element_type=jnp.float32) + bloc.reshape(1, 1, 1, -1)
    scores = jnp.einsum('nhwm,mk->nhwk', h, wsc.astype(jnp.bfloat16),
                        preferred_element_type=jnp.float32) + bsc.reshape(1, 1, 1, -1)
    A = wloc.shape[-1] // 4
    return (locs.reshape(n, hh * ww * A, 4), scores.reshape(n, hh * ww * A, 2))


# ----------------------------------- main -------------------------------------

if __name__ == "__main__":
    # Small, module-consistent shapes.
    N, Cin, Cmid, H, W = 2, 32, 32, 8, 8
    ratios = [0.5, 1, 2]
    anchor_scales = [8, 16, 32]
    feat_stride = 32
    anchor_base = generate_anchor_base(ratios=ratios, anchor_scales=anchor_scales)
    A = anchor_base.shape[0]  # 9
    img_size = (H * feat_stride, W * feat_stride)

    key = jax.random.PRNGKey(0)
    kx, k1, k2, k3, k4, k5, k6 = jax.random.split(key, 7)

    x = jax.random.normal(kx, (N, Cin, H, W), jnp.float32)

    # Deterministic Gaussian-scaled init (module default: gaussian * 0.1).
    w1 = 0.1 * jax.random.normal(k1, (3, 3, Cin, Cmid), jnp.float32)
    b1 = 0.1 * jax.random.normal(k2, (1, Cmid), jnp.float32)
    wloc = 0.1 * jax.random.normal(k3, (Cmid, 4 * A), jnp.float32)
    bloc = 0.1 * jax.random.normal(k4, (1, 4 * A), jnp.float32)
    wsc = 0.1 * jax.random.normal(k5, (Cmid, 2 * A), jnp.float32)
    bsc = 0.1 * jax.random.normal(k6, (1, 2 * A), jnp.float32)
    params = (w1, b1, wloc, bloc, wsc, bsc)

    rpn_locs, rpn_scores, rpn_fg_scores, anchor = rpn_forward(
        x, params, anchor_base, feat_stride, img_size, scale=1.0)
    jax.block_until_ready((rpn_locs, rpn_scores, rpn_fg_scores))

    # Correctness check against a consistent pure-JAX reference.
    ref_locs, ref_scores = rpn_reference(x, params)
    assert rpn_locs.shape == (N, H * W * A, 4)
    assert rpn_scores.shape == (N, H * W * A, 2)
    assert rpn_fg_scores.shape == (N, H * W * A)
    assert anchor.shape == (H * W * A, 4)
    np.testing.assert_allclose(np.asarray(rpn_locs), np.asarray(ref_locs),
                               rtol=2e-3, atol=2e-3)
    np.testing.assert_allclose(np.asarray(rpn_scores), np.asarray(ref_scores),
                               rtol=2e-3, atol=2e-3)
    ref_fg = jax.nn.softmax(
        ref_scores.reshape(N, H, W, A, 2), axis=-1)[..., 1].reshape(N, -1)
    np.testing.assert_allclose(np.asarray(rpn_fg_scores), np.asarray(ref_fg),
                               rtol=2e-3, atol=2e-3)

    print("KERNEL_OK")
</pallas_src>

<mosaic_0001>
module attributes {stable_mosaic.version = 11 : i64} {
  func.func @rpn_head_kernel(%arg0: i32, %arg1: memref<128x288xbf16, #tpu.memory_space<vmem>>, %arg2: memref<288x32xbf16, #tpu.memory_space<vmem>>, %arg3: memref<1x32xf32, #tpu.memory_space<vmem>>, %arg4: memref<32x128xbf16, #tpu.memory_space<vmem>>, %arg5: memref<1x128xf32, #tpu.memory_space<vmem>>, %arg6: memref<128x128xf32, #tpu.memory_space<vmem>>) attributes {dimension_semantics = [#tpu.dimension_semantics<parallel>], iteration_bounds = array<i64: 1>, scalar_prefetch = 0 : i64, scratch_operands = 0 : i64, tpu.core_type = #tpu.core_type<tc>, window_params = [{transform_indices = @transform_0, window_bounds = array<i64: 128, 288>}, {pipeline_mode = #tpu.pipeline_mode<synchronous>, transform_indices = @transform_1, window_bounds = array<i64: 288, 32>}, {pipeline_mode = #tpu.pipeline_mode<synchronous>, transform_indices = @transform_2, window_bounds = array<i64: 1, 32>}, {pipeline_mode = #tpu.pipeline_mode<synchronous>, transform_indices = @transform_3, window_bounds = array<i64: 32, 128>}, {pipeline_mode = #tpu.pipeline_mode<synchronous>, transform_indices = @transform_4, window_bounds = array<i64: 1, 128>}, {transform_indices = @transform_5, window_bounds = array<i64: 128, 128>}]} {
    %c0 = arith.constant 0 : index
    %c0_0 = arith.constant 0 : index
    %0 = vector.load %arg1[%c0, %c0_0] : memref<128x288xbf16, #tpu.memory_space<vmem>>, vector<128x288xbf16>
    %c0_1 = arith.constant 0 : index
    %c0_2 = arith.constant 0 : index
    %1 = vector.load %arg2[%c0_1, %c0_2] : memref<288x32xbf16, #tpu.memory_space<vmem>>, vector<288x32xbf16>
    %cst = arith.constant dense<0.000000e+00> : vector<128x32xf32>
    %2 = tpu.matmul %0, %1, %cst {dimension_numbers = #tpu.dot_dimension_numbers<[1], [0], [0], [1], [0, 0, 1, 1], [], []>} : vector<128x288xbf16>, vector<288x32xbf16>, vector<128x32xf32> -> vector<128x32xf32>
    %c0_3 = arith.constant 0 : index
    %c0_4 = arith.constant 0 : index
    %3 = vector.load %arg3[%c0_3, %c0_4] : memref<1x32xf32, #tpu.memory_space<vmem>>, vector<1x32xf32>
    %4 = vector.broadcast %3 : vector<1x32xf32> to vector<128x32xf32>
    %5 = arith.addf %2, %4 : vector<128x32xf32>
    %cst_5 = arith.constant 0.000000e+00 : f32
    %6 = vector.broadcast %cst_5 : f32 to vector<128x32xf32>
    %7 = arith.maximumf %5, %6 : vector<128x32xf32>
    %8 = arith.truncf %7 : vector<128x32xf32> to vector<128x32xbf16>
    %c0_6 = arith.constant 0 : index
    %c0_7 = arith.constant 0 : index
    %9 = vector.load %arg4[%c0_6, %c0_7] : memref<32x128xbf16, #tpu.memory_space<vmem>>, vector<32x128xbf16>
    %cst_8 = arith.constant dense<0.000000e+00> : vector<128x128xf32>
    %10 = tpu.matmul %8, %9, %cst_8 {dimension_numbers = #tpu.dot_dimension_numbers<[1], [0], [0], [1], [0, 0, 1, 1], [], []>} : vector<128x32xbf16>, vector<32x128xbf16>, vector<128x128xf32> -> vector<128x128xf32>
    %c0_9 = arith.constant 0 : index
    %c0_10 = arith.constant 0 : index
    %11 = vector.load %arg5[%c0_9, %c0_10] : memref<1x128xf32, #tpu.memory_space<vmem>>, vector<1x128xf32>
    %12 = vector.broadcast %11 : vector<1x128xf32> to vector<128x128xf32>
    %13 = arith.addf %10, %12 : vector<128x128xf32>
    %c0_11 = arith.constant 0 : index
    %c0_12 = arith.constant 0 : index
    %14 = vector.load %arg6[%c0_11, %c0_12] : memref<128x128xf32, #tpu.memory_space<vmem>>, vector<128x128xf32>
    tpu.vector_store %arg6[%c0_11, %c0_12], %13 {strides = array<i32>} : memref<128x128xf32, #tpu.memory_space<vmem>>, vector<128x128xf32>,
    return
  }
  func.func @transform_0(%arg0: i32) -> (i32, i32) {
    %c0_i32 = arith.constant 0 : i32
    %c0_i32_0 = arith.constant 0 : i32
    return %arg0, %c0_i32 : i32, i32
  }
  func.func @transform_1(%arg0: i32) -> (i32, i32) {
    %c0_i32 = arith.constant 0 : i32
    %c0_i32_0 = arith.constant 0 : i32
    %c0_i32_1 = arith.constant 0 : i32
    return %c0_i32, %c0_i32_0 : i32, i32
  }
  func.func @transform_2(%arg0: i32) -> (i32, i32) {
    %c0_i32 = arith.constant 0 : i32
    %c0_i32_0 = arith.constant 0 : i32
    %c0_i32_1 = arith.constant 0 : i32
    return %c0_i32, %c0_i32_0 : i32, i32
  }
  func.func @transform_3(%arg0: i32) -> (i32, i32) {
    %c0_i32 = arith.constant 0 : i32
    %c0_i32_0 = arith.constant 0 : i32
    %c0_i32_1 = arith.constant 0 : i32
    return %c0_i32, %c0_i32_0 : i32, i32
  }
  func.func @transform_4(%arg0: i32) -> (i32, i32) {
    %c0_i32 = arith.constant 0 : i32
    %c0_i32_0 = arith.constant 0 : i32
    %c0_i32_1 = arith.constant 0 : i32
    return %c0_i32, %c0_i32_0 : i32, i32
  }
  func.func @transform_5(%arg0: i32) -> (i32, i32) {
    %c0_i32 = arith.constant 0 : i32
    %c0_i32_0 = arith.constant 0 : i32
    return %arg0, %c0_i32 : i32, i32
  }
}

</mosaic_0001>

<llo_original>
// kernel: _rpn_compute.1
$region0: #{_rpn_compute.1}
  #allocation0 [shape = 'u32[]', space=smem, size = 0x4, offset = 0x4, fixed_abs, tag = 'smem constant byte address 0x4 - core index']
  #allocation1 [shape = 'u32[144,128]{1,0:T(1,128)}', space=vmem, size = 0x12000, scoped, tag = 'internal scratch']
  %s0 = inlined_call_operand.vmem [shape: bf16[128,288], index: 0, kind: input, shape index: {}]
  %s1 = inlined_call_operand.vmem [shape: bf16[288,32], index: 1, kind: input, shape index: {}]
  %s2 = inlined_call_operand.vmem [shape: f32[1,32], index: 2, kind: input, shape index: {}]
  %s3 = inlined_call_operand.vmem [shape: bf16[32,128], index: 3, kind: input, shape index: {}]
  %s4 = inlined_call_operand.vmem [shape: f32[1,128], index: 4, kind: input, shape index: {}]
  %s5 = inlined_call_operand.vmem [shape: f32[128,128], index: 5, kind: output, shape index: {}]
  %s6 = sld [smem:[#allocation0]]
  $region30: #{_rpn_compute.1} parent=0
    _
  %s8 = ssub.s32 1, %s6
  %s9 = scalar_select 0, %s8, %s6
  // Predicated region
  $region2: #{_rpn_compute.1} parent=0 // pred_check
    _
  $region3: #{_rpn_compute.1} parent=0 // pred_check_branch
    %11 = sbr.rel (0) target = $region5
  $region4: #{_rpn_compute.1} parent=0 // pred_region
    _
  $region5: #{_rpn_compute.1} parent=0 // pred_fallthru
    _
  // Predicated region
  $region6: #{_rpn_compute.1} parent=0 // pred_check
    _
  $region7: #{_rpn_compute.1} parent=0 // pred_check_branch
    %13 = sbr.rel (0) target = $region9
  $region8: #{_rpn_compute.1} parent=0 // pred_region
    _
  $region9: #{_rpn_compute.1} parent=0 // pred_fallthru
    _
  // Predicated region
  $region10: #{_rpn_compute.1} parent=0 // pred_check
    _
  $region11: #{_rpn_compute.1} parent=0 // pred_check_branch
    %15 = sbr.rel (0) target = $region13
  $region12: #{_rpn_compute.1} parent=0 // pred_region
    _
  $region13: #{_rpn_compute.1} parent=0 // pred_fallthru
    _
  // Predicated region
  $region14: #{_rpn_compute.1} parent=0 // pred_check
    _
  $region15: #{_rpn_compute.1} parent=0 // pred_check_branch
    %17 = sbr.rel (0) target = $region17
  $region16: #{_rpn_compute.1} parent=0 // pred_region
    _
  $region17: #{_rpn_compute.1} parent=0 // pred_fallthru
    _
  // Predicated region
  $region18: #{_rpn_compute.1} parent=0 // pred_check
    _
  $region19: #{_rpn_compute.1} parent=0 // pred_check_branch
    %19 = sbr.rel (0) target = $region21
  $region20: #{_rpn_compute.1} parent=0 // pred_region
    _
  $region21: #{_rpn_compute.1} parent=0 // pred_fallthru
    _
  %v21 = vld [vmem:[%s0] sm:$0xff]
  %v22 = vld [vmem:[%s0 + $0x8] sm:$0xf]
  %v23 = vld [vmem:[%s0 + $0xc] sm:$0xff]
  %v24 = vld [vmem:[%s0 + $0x14] sm:$0xf]
  %v25 = vld [vmem:[%s0 + $0x18] sm:$0xff]
  %v26 = vld [vmem:[%s0 + $0x20] sm:$0xf]
  %v27 = vld [vmem:[%s0 + $0x24] sm:$0xff]
  %v28 = vld [vmem:[%s0 + $0x2c] sm:$0xf]
  %v29 = vld [vmem:[%s0 + $0x30] sm:$0xff]
  %v30 = vld [vmem:[%s0 + $0x38] sm:$0xf]
  %v31 = vld [vmem:[%s0 + $0x3c] sm:$0xff]
  %v32 = vld [vmem:[%s0 + $0x44] sm:$0xf]
  %v33 = vld [vmem:[%s0 + $0x48] sm:$0xff]
  %v34 = vld [vmem:[%s0 + $0x50] sm:$0xf]
  %v35 = vld [vmem:[%s0 + $0x54] sm:$0xff]
  %v36 = vld [vmem:[%s0 + $0x5c] sm:$0xf]
  %v37 = vld [vmem:[%s0 + $0x60] sm:$0xff]
  %v38 = vld [vmem:[%s0 + $0x68] sm:$0xf]
  %v39 = vld [vmem:[%s0 + $0x6c] sm:$0xff]
  %v40 = vld [vmem:[%s0 + $0x74] sm:$0xf]
  %v41 = vld [vmem:[%s0 + $0x78] sm:$0xff]
  %v42 = vld [vmem:[%s0 + $0x80] sm:$0xf]
  %v43 = vld [vmem:[%s0 + $0x84] sm:$0xff]
  %v44 = vld [vmem:[%s0 + $0x8c] sm:$0xf]
  %v45 = vld [vmem:[%s0 + $0x90] sm:$0xff]
  %v46 = vld [vmem:[%s0 + $0x98] sm:$0xf]
  %v47 = vld [vmem:[%s0 + $0x9c] sm:$0xff]
  %v48 = vld [vmem:[%s0 + $0xa4] sm:$0xf]
  %v49 = vld [vmem:[%s0 + $0xa8] sm:$0xff]
  %v50 = vld [vmem:[%s0 + $0xb0] sm:$0xf]
  %v51 = vld [vmem:[%s0 + $0xb4] sm:$0xff]
  %v52 = vld [vmem:[%s0 + $0xbc] sm:$0xf]
  %v53 = vld [vmem:[%s1] sm:$0xf]
  %v54 = vld [vmem:[%s1 + $0x4] sm:$0xf]
  %v55 = vld [vmem:[%s1 + $0x8] sm:$0xf]
  %v56 = vld [vmem:[%s1 + $0xc] sm:$0xf]
  %v57 = vld [vmem:[%s1 + $0x10] sm:$0xf]
  %v58 = vld [vmem:[%s1 + $0x14] sm:$0xf]
  %v59 = vld [vmem:[%s1 + $0x18] sm:$0xf]
  %v60 = vld [vmem:[%s1 + $0x1c] sm:$0xf]
  %v61 = vld [vmem:[%s1 + $0x20] sm:$0xf]
  %v62 = vld [vmem:[%s1 + $0x24] sm:$0xf]
  %v63 = vld [vmem:[%s1 + $0x28] sm:$0xf]
  %v64 = vld [vmem:[%s1 + $0x2c] sm:$0xf]
  %v65 = vld [vmem:[%s1 + $0x30] sm:$0xf]
  %v66 = vld [vmem:[%s1 + $0x34] sm:$0xf]
  %v67 = vld [vmem:[%s1 + $0x38] sm:$0xf]
  %v68 = vld [vmem:[%s1 + $0x3c] sm:$0xf]
  %v69 = vld [vmem:[%s1 + $0x40] sm:$0xf]
  %v70 = vld [vmem:[%s1 + $0x44] sm:$0xf]
  %v71 = vld [vmem:[%s1 + $0x48] sm:$0xf]
  %v72 = vld [vmem:[%s1 + $0x4c] sm:$0xf]
  %v73 = vld [vmem:[%s1 + $0x50] sm:$0xf]
  %v74 = vld [vmem:[%s1 + $0x54] sm:$0xf]
  %v75 = vld [vmem:[%s1 + $0x58] sm:$0xf]
  %v76 = vld [vmem:[%s1 + $0x5c] sm:$0xf]
  %v77 = vld [vmem:[%s1 + $0x60] sm:$0xf]
  %v78 = vld [vmem:[%s1 + $0x64] sm:$0xf]
  %v79 = vld [vmem:[%s1 + $0x68] sm:$0xf]
  %v80 = vld [vmem:[%s1 + $0x6c] sm:$0xf]
  %v81 = vld [vmem:[%s1 + $0x70] sm:$0xf]
  %v82 = vld [vmem:[%s1 + $0x74] sm:$0xf]
  %v83 = vld [vmem:[%s1 + $0x78] sm:$0xf]
  %v84 = vld [vmem:[%s1 + $0x7c] sm:$0xf]
  %v85 = vld [vmem:[%s1 + $0x80] sm:$0xf]
  %v86 = vld [vmem:[%s1 + $0x84] sm:$0xf]
  %v87 = vld [vmem:[%s1 + $0x88] sm:$0xf]
  %v88 = vld [vmem:[%s1 + $0x8c] sm:$0xf]
  %v89 = vld [vmem:[%s2] sm:$0x1]
  %v91 = vlaneseq
  %v92 = vshrl.u32 %v91, 7
  %v93 = vsub.s32 0, %v92
  %v94 = vrot.slane %v89, %v93
  %v128 = vunpack.c.l.b16 %v21
  %v129 = vunpack.c.h.b16 %v21
  %v130 = vunpack.c.l.b16 %v22
  %v131 = vunpack.c.l.b16 %v23
  %v132 = vunpack.c.h.b16 %v23
  %v133 = vunpack.c.l.b16 %v24
  %v134 = vunpack.c.l.b16 %v25
  %v135 = vunpack.c.h.b16 %v25
  %v136 = vunpack.c.l.b16 %v26
  %v137 = vunpack.c.l.b16 %v27
  %v138 = vunpack.c.h.b16 %v27
  %v139 = vunpack.c.l.b16 %v28
  %v140 = vunpack.c.l.b16 %v29
  %v141 = vunpack.c.h.b16 %v29
  %v142 = vunpack.c.l.b16 %v30
  %v143 = vunpack.c.l.b16 %v31
  %v144 = vunpack.c.h.b16 %v31
  %v145 = vunpack.c.l.b16 %v32
  %v146 = vunpack.c.l.b16 %v33
  %v147 = vunpack.c.h.b16 %v33
  %v148 = vunpack.c.l.b16 %v34
  %v149 = vunpack.c.l.b16 %v35
  %v150 = vunpack.c.h.b16 %v35
  %v151 = vunpack.c.l.b16 %v36
  %v152 = vunpack.c.l.b16 %v37
  %v153 = vunpack.c.h.b16 %v37
  %v154 = vunpack.c.l.b16 %v38
  %v155 = vunpack.c.l.b16 %v39
  %v156 = vunpack.c.h.b16 %v39
  %v157 = vunpack.c.l.b16 %v40
  %v158 = vunpack.c.l.b16 %v41
  %v159 = vunpack.c.h.b16 %v41
  %v160 = vunpack.c.l.b16 %v42
  %v161 = vunpack.c.l.b16 %v43
  %v162 = vunpack.c.h.b16 %v43
  %v163 = vunpack.c.l.b16 %v44
  %v164 = vunpack.c.l.b16 %v45
  %v165 = vunpack.c.h.b16 %v45
  %v166 = vunpack.c.l.b16 %v46
  %v167 = vunpack.c.l.b16 %v47
  %v168 = vunpack.c.h.b16 %v47
  %v169 = vunpack.c.l.b16 %v48
  %v170 = vunpack.c.l.b16 %v49
  %v171 = vunpack.c.h.b16 %v49
  %v172 = vunpack.c.l.b16 %v50
  %v173 = vunpack.c.l.b16 %v51
  %v174 = vunpack.c.h.b16 %v51
  %v175 = vunpack.c.l.b16 %v52
  %v176 = vpack.c.b16 %v131, %v128
  %v177 = vpack.c.b16 %v132, %v129
  %v178 = vpack.c.b16 %v133, %v130
  %v179 = vpack.c.b16 %v137, %v134
  %v180 = vpack.c.b16 %v138, %v135
  %v181 = vpack.c.b16 %v139, %v136
  %v182 = vpack.c.b16 %v143, %v140
  %v183 = vpack.c.b16 %v144, %v141
  %v184 = vpack.c.b16 %v145, %v142
  %v185 = vpack.c.b16 %v149, %v146
  %v186 = vpack.c.b16 %v150, %v147
  %v187 = vpack.c.b16 %v151, %v148
  %v188 = vpack.c.b16 %v155, %v152
  %v189 = vpack.c.b16 %v156, %v153
  %v190 = vpack.c.b16 %v157, %v154
  %v191 = vpack.c.b16 %v161, %v158
  %v192 = vpack.c.b16 %v162, %v159
  %v193 = vpack.c.b16 %v163, %v160
  %v194 = vpack.c.b16 %v167, %v164
  %v195 = vpack.c.b16 %v168, %v165
  %v196 = vpack.c.b16 %v169, %v166
  %v197 = vpack.c.b16 %v173, %v170
  %v198 = vpack.c.b16 %v174, %v171
  %v199 = vpack.c.b16 %v175, %v172
  %v252 = vunpack.c.l.b16 %v53
  %v253 = vunpack.c.l.b16 %v54
  %v254 = vunpack.c.l.b16 %v55
  %v255 = vunpack.c.l.b16 %v56
  %v256 = vunpack.c.l.b16 %v57
  %v257 = vunpack.c.l.b16 %v58
  %v258 = vunpack.c.l.b16 %v59
  %v259 = vunpack.c.l.b16 %v60
  %v260 = vunpack.c.l.b16 %v61
  %v261 = vunpack.c.l.b16 %v62
  %v262 = vunpack.c.l.b16 %v63
  %v263 = vunpack.c.l.b16 %v64
  %v264 = vunpack.c.l.b16 %v65
  %v265 = vunpack.c.l.b16 %v66
  %v266 = vunpack.c.l.b16 %v67
  %v267 = vunpack.c.l.b16 %v68
  %v268 = vunpack.c.l.b16 %v69
  %v269 = vunpack.c.l.b16 %v70
  %v270 = vunpack.c.l.b16 %v71
  %v271 = vunpack.c.l.b16 %v72
  %v272 = vunpack.c.l.b16 %v73
  %v273 = vunpack.c.l.b16 %v74
  %v274 = vunpack.c.l.b16 %v75
  %v275 = vunpack.c.l.b16 %v76
  %v276 = vunpack.c.l.b16 %v77
  %v277 = vunpack.c.l.b16 %v78
  %v278 = vunpack.c.l.b16 %v79
  %v279 = vunpack.c.l.b16 %v80
  %v280 = vunpack.c.l.b16 %v81
  %v281 = vunpack.c.l.b16 %v82
  %v282 = vunpack.c.l.b16 %v83
  %v283 = vunpack.c.l.b16 %v84
  %v284 = vunpack.c.l.b16 %v85
  %v285 = vunpack.c.l.b16 %v86
  %v286 = vunpack.c.l.b16 %v87
  %v287 = vunpack.c.l.b16 %v88
  %v288 = vpack.c.b16 %v253, %v252
  %v289 = vpack.c.b16 %v255, %v254
  %v290 = vpack.c.b16 %v257, %v256
  %v291 = vpack.c.b16 %v259, %v258
  %v292 = vpack.c.b16 %v261, %v260
  %v293 = vpack.c.b16 %v263, %v262
  %v294 = vpack.c.b16 %v265, %v264
  %v295 = vpack.c.b16 %v267, %v266
  %v296 = vpack.c.b16 %v269, %v268
  %v297 = vpack.c.b16 %v271, %v270
  %v298 = vpack.c.b16 %v273, %v272
  %v299 = vpack.c.b16 %v275, %v274
  %v300 = vpack.c.b16 %v277, %v276
  %v301 = vpack.c.b16 %v279, %v278
  %v302 = vpack.c.b16 %v281, %v280
  %v303 = vpack.c.b16 %v283, %v282
  %v304 = vpack.c.b16 %v285, %v284
  %v305 = vpack.c.b16 %v287, %v286
  %vm324 = vcmask 261120
  %v326 = vsel %vm324, %v178, 0
  %v329 = vsel %vm324, %v181, 0
  %v332 = vsel %vm324, %v184, 0
  %v335 = vsel %vm324, %v187, 0
  %v338 = vsel %vm324, %v190, 0
  %v341 = vsel %vm324, %v193, 0
  %v344 = vsel %vm324, %v196, 0
  %v347 = vsel %vm324, %v199, 0
  %349 = vmatprep.subr.bf16.mxu0 0
  %350 = vmatpush1.bf16.msra.mxu0 %v288
  %351 = vmatprep.subr.bf16.mxu0 0
  %352 = vmatpush1.bf16.msra.mxu0 %v289
  %353 = vmatprep.subr.bf16.mxu0 0
  %354 = vmatpush1.bf16.msra.mxu0 %v290
  %355 = vmatprep.subr.bf16.mxu0 0
  %356 = vmatpush1.bf16.msra.mxu0 %v291
  %357 = vmatprep.subr.bf16.mxu0 0
  %358 = vmatpush1.bf16.msra.mxu0 %v292
  %359 = vmatprep.subr.bf16.mxu0 0
  %360 = vmatpush1.bf16.msra.mxu0 %v293
  %361 = vmatprep.subr.bf16.mxu0 0
  %362 = vmatpush1.bf16.msra.mxu0 %v294
  %363 = vmatprep.subr.bf16.mxu0 0
  %364 = vmatpush1.bf16.msra.mxu0 %v295
  %365 = vmatprep.subr.bf16.mxu0 0
  %366 = vmatpush1.bf16.msra.mxu0 %v296
  %367 = vmatprep.subr.bf16.mxu0 0
  %368 = vmatpush1.bf16.msra.mxu0 %v297
  %369 = vmatprep.subr.bf16.mxu0 0
  %370 = vmatpush1.bf16.msra.mxu0 %v298
  %371 = vmatprep.subr.bf16.mxu0 0
  %372 = vmatpush1.bf16.msra.mxu0 %v299
  %373 = vmatprep.subr.bf16.mxu0 0
  %374 = vmatpush1.bf16.msra.mxu0 %v300
  %375 = vmatprep.subr.bf16.mxu0 0
  %376 = vmatpush1.bf16.msra.mxu0 %v301
  %377 = vmatprep.subr.bf16.mxu0 0
  %378 = vmatpush1.bf16.msra.mxu0 %v302
  %379 = vmatprep.subr.bf16.mxu0 0
  %380 = vmatpush1.bf16.msra.mxu0 %v303
  %381 = vmatprep.mubr.bf16.mxu0 %v177
  %382 = vmatmul.mubr.bf16.gmra.mrb[0].mxu0 %v176
  %v383 = vpop.f32.mrb[0].mxu0
  %v384 = vadd.f32 %v94, %v383
  %v385 = vpop.f32.mrb[0].mxu0
  %v386 = vpop.f32.mrb[0].mxu0
  %v387 = vadd.f32 %v94, %v386
  %v388 = vpop.f32.mrb[0].mxu0
  %389 = vmatprep.mubr.bf16.mxu0 %v180
  %390 = vmatmul.mubr.bf16.gmra.mrb[0].mxu0 %v179
  %v391 = vpop.f32.mrb[0].mxu0
  %v392 = vadd.f32 %v94, %v391
  %v393 = vpop.f32.mrb[0].mxu0
  %v394 = vpop.f32.mrb[0].mxu0
  %v395 = vadd.f32 %v94, %v394
  %v396 = vpop.f32.mrb[0].mxu0
  %397 = vmatprep.mubr.bf16.mxu0 %v183
  %398 = vmatmul.mubr.bf16.gmra.mrb[0].mxu0 %v182
  %v399 = vpop.f32.mrb[0].mxu0
  %v400 = vadd.f32 %v94, %v399
  %v401 = vpop.f32.mrb[0].mxu0
  %v402 = vpop.f32.mrb[0].mxu0
  %v403 = vadd.f32 %v94, %v402
  %v404 = vpop.f32.mrb[0].mxu0
  %405 = vmatprep.mubr.bf16.mxu0 %v186
  %406 = vmatmul.mubr.bf16.gmra.mrb[0].mxu0 %v185
  %v407 = vpop.f32.mrb[0].mxu0
  %v408 = vadd.f32 %v94, %v407
  %v409 = vpop.f32.mrb[0].mxu0
  %v410 = vpop.f32.mrb[0].mxu0
  %v411 = vadd.f32 %v94, %v410
  %v412 = vpop.f32.mrb[0].mxu0
  %413 = vmatprep.mubr.bf16.mxu0 %v189
  %414 = vmatmul.mubr.bf16.gmra.mrb[0].mxu0 %v188
  %v415 = vpop.f32.mrb[0].mxu0
  %v416 = vadd.f32 %v94, %v415
  %v417 = vpop.f32.mrb[0].mxu0
  %v418 = vpop.f32.mrb[0].mxu0
  %v419 = vadd.f32 %v94, %v418
  %v420 = vpop.f32.mrb[0].mxu0
  %421 = vmatprep.mubr.bf16.mxu0 %v192
  %422 = vmatmul.mubr.bf16.gmra.mrb[0].mxu0 %v191
  %v423 = vpop.f32.mrb[0].mxu0
  %v424 = vadd.f32 %v94, %v423
  %v425 = vpop.f32.mrb[0].mxu0
  %v426 = vpop.f32.mrb[0].mxu0
  %v427 = vadd.f32 %v94, %v426
  %v428 = vpop.f32.mrb[0].mxu0
  %429 = vmatprep.mubr.bf16.mxu0 %v195
  %430 = vmatmul.mubr.bf16.gmra.mrb[0].mxu0 %v194
  %v431 = vpop.f32.mrb[0].mxu0
  %v432 = vadd.f32 %v94, %v431
  %v433 = vpop.f32.mrb[0].mxu0
  %v434 = vpop.f32.mrb[0].mxu0
  %v435 = vadd.f32 %v94, %v434
  %v436 = vpop.f32.mrb[0].mxu0
  %437 = vmatprep.mubr.bf16.mxu0 %v198
  %438 = vmatmul.mubr.bf16.gmra.mrb[0].mxu0 %v197
  %v439 = vpop.f32.mrb[0].mxu0
  %v440 = vadd.f32 %v94, %v439
  %v441 = vpop.f32.mrb[0].mxu0
  %v442 = vpop.f32.mrb[0].mxu0
  %v443 = vadd.f32 %v94, %v442
  %v444 = vpop.f32.mrb[0].mxu0
  %445 = vdwg.mxu0
  %446 = vmatprep.subr.bf16.mxu0 0
  %447 = vmatpush1.bf16.msra.mxu0 %v304
  %448 = vmatprep.subr.bf16.mxu0 0
  %449 = vmatpush1.bf16.msra.mxu0 %v305
  %450 = vmatprep.subr.bf16.mxu0 0
  %451 = vmatpush1.bf16.msra.mxu0 0
  %452 = vmatprep.subr.bf16.mxu0 0
  %453 = vmatpush1.bf16.msra.mxu0 0
  %454 = vmatprep.subr.bf16.mxu0 0
  %455 = vmatpush1.bf16.msra.mxu0 0
  %456 = vmatprep.subr.bf16.mxu0 0
  %457 = vmatpush1.bf16.msra.mxu0 0
  %458 = vmatprep.subr.bf16.mxu0 0
  %459 = vmatpush1.bf16.msra.mxu0 0
  %460 = vmatprep.subr.bf16.mxu0 0
  %461 = vmatpush1.bf16.msra.mxu0 0
  %462 = vmatprep.subr.bf16.mxu0 0
  %463 = vmatpush1.bf16.msra.mxu0 0
  %464 = vmatprep.subr.bf16.mxu0 0
  %465 = vmatpush1.bf16.msra.mxu0 0
  %466 = vmatprep.subr.bf16.mxu0 0
  %467 = vmatpush1.bf16.msra.mxu0 0
  %468 = vmatprep.subr.bf16.mxu0 0
  %469 = vmatpush1.bf16.msra.mxu0 0
  %470 = vmatprep.subr.bf16.mxu0 0
  %471 = vmatpush1.bf16.msra.mxu0 0
  %472 = vmatprep.subr.bf16.mxu0 0
  %473 = vmatpush1.bf16.msra.mxu0 0
  %474 = vmatprep.subr.bf16.mxu0 0
  %475 = vmatpush1.bf16.msra.mxu0 0
  %476 = vmatprep.subr.bf16.mxu0 0
  %477 = vmatpush1.bf16.msra.mxu0 0
  %478 = vmatprep.mubr.bf16.mxu0 0
  %479 = vmatmul.mubr.bf16.gmra.mrb[0].mxu0 %v326
  %v480 = vpop.f32.mrb[0].mxu0
  %v481 = vadd.f32 %v384, %v480
  %v482 = vpop.f32.mrb[0].mxu0
  %v483 = vpop.f32.mrb[0].mxu0
  %v484 = vadd.f32 %v387, %v483
  %v485 = vpop.f32.mrb[0].mxu0
  %486 = vmatprep.mubr.bf16.mxu0 0
  %487 = vmatmul.mubr.bf16.gmra.mrb[0].mxu0 %v329
  %v488 = vpop.f32.mrb[0].mxu0
  %v489 = vadd.f32 %v392, %v488
  %v490 = vpop.f32.mrb[0].mxu0
  %v491 = vpop.f32.mrb[0].mxu0
  %v492 = vadd.f32 %v395, %v491
  %v493 = vpop.f32.mrb[0].mxu0
  %494 = vmatprep.mubr.bf16.mxu0 0
  %495 = vmatmul.mubr.bf16.gmra.mrb[0].mxu0 %v332
  %v496 = vpop.f32.mrb[0].mxu0
  %v497 = vadd.f32 %v400, %v496
  %v498 = vpop.f32.mrb[0].mxu0
  %v499 = vpop.f32.mrb[0].mxu0
  %v500 = vadd.f32 %v403, %v499
  %v501 = vpop.f32.mrb[0].mxu0
  %502 = vmatprep.mubr.bf16.mxu0 0
  %503 = vmatmul.mubr.bf16.gmra.mrb[0].mxu0 %v335
  %v504 = vpop.f32.mrb[0].mxu0
  %v505 = vadd.f32 %v408, %v504
  %v506 = vpop.f32.mrb[0].mxu0
  %v507 = vpop.f32.mrb[0].mxu0
  %v508 = vadd.f32 %v411, %v507
  %v509 = vpop.f32.mrb[0].mxu0
  %510 = vmatprep.mubr.bf16.mxu0 0
  %511 = vmatmul.mubr.bf16.gmra.mrb[0].mxu0 %v338
  %v512 = vpop.f32.mrb[0].mxu0
  %v513 = vadd.f32 %v416, %v512
  %v514 = vpop.f32.mrb[0].mxu0
  %v515 = vpop.f32.mrb[0].mxu0
  %v516 = vadd.f32 %v419, %v515
  %v517 = vpop.f32.mrb[0].mxu0
  %518 = vmatprep.mubr.bf16.mxu0 0
  %519 = vmatmul.mubr.bf16.gmra.mrb[0].mxu0 %v341
  %v520 = vpop.f32.mrb[0].mxu0
  %v521 = vadd.f32 %v424, %v520
  %v522 = vpop.f32.mrb[0].mxu0
  %v523 = vpop.f32.mrb[0].mxu0
  %v524 = vadd.f32 %v427, %v523
  %v525 = vpop.f32.mrb[0].mxu0
  %526 = vmatprep.mubr.bf16.mxu0 0
  %527 = vmatmul.mubr.bf16.gmra.mrb[0].mxu0 %v344
  %v528 = vpop.f32.mrb[0].mxu0
  %v529 = vadd.f32 %v432, %v528
  %v530 = vpop.f32.mrb[0].mxu0
  %v531 = vpop.f32.mrb[0].mxu0
  %v532 = vadd.f32 %v435, %v531
  %v533 = vpop.f32.mrb[0].mxu0
  %534 = vmatprep.mubr.bf16.mxu0 0
  %535 = vmatmul.mubr.bf16.gmra.mrb[0].mxu0 %v347
  %v536 = vpop.f32.mrb[0].mxu0
  %v537 = vadd.f32 %v440, %v536
  %v538 = vpop.f32.mrb[0].mxu0
  %v539 = vpop.f32.mrb[0].mxu0
  %v540 = vadd.f32 %v443, %v539
  %v541 = vpop.f32.mrb[0].mxu0
  %542 = vdwg.mxu0
  %v543 = vmax.f32 %v481, 0.0
  %v544 = vmax.f32 %v484, 0.0
  %v545 = vmax.f32 %v489, 0.0
  %v546 = vmax.f32 %v492, 0.0
  %v547 = vmax.f32 %v497, 0.0
  %v548 = vmax.f32 %v500, 0.0
  %v549 = vmax.f32 %v505, 0.0
  %v550 = vmax.f32 %v508, 0.0
  %v551 = vmax.f32 %v513, 0.0
  %v552 = vmax.f32 %v516, 0.0
  %v553 = vmax.f32 %v521, 0.0
  %v554 = vmax.f32 %v524, 0.0
  %v555 = vmax.f32 %v529, 0.0
  %v556 = vmax.f32 %v532, 0.0
  %v557 = vmax.f32 %v537, 0.0
  %v558 = vmax.f32 %v540, 0.0
  %v559 = vpack.c.bf16 %v544, %v543
  %v560 = vpack.c.bf16 %v546, %v545
  %v561 = vpack.c.bf16 %v548, %v547
  %v562 = vpack.c.bf16 %v550, %v549
  %v563 = vpack.c.bf16 %v552, %v551
  %v564 = vpack.c.bf16 %v554, %v553
  %v565 = vpack.c.bf16 %v556, %v555
  %v566 = vpack.c.bf16 %v558, %v557
  %v567 = vld [vmem:[%s3] sm:$0xf]
  %v568 = vld [vmem:[%s3 + $0x4] sm:$0xf]
  %v569 = vld [vmem:[%s3 + $0x8] sm:$0xf]
  %v570 = vld [vmem:[%s3 + $0xc] sm:$0xf]
  %v571 = vld [vmem:[%s4] sm:$0x1]
  %v573 = vlaneseq
  %v574 = vshrl.u32 %v573, 7
  %v575 = vsub.s32 0, %v574
  %v576 = vrot.slane %v571, %v575
  %v582 = vunpack.c.l.b16 %v567
  %v583 = vunpack.c.l.b16 %v568
  %v584 = vunpack.c.l.b16 %v569
  %v585 = vunpack.c.l.b16 %v570
  %v586 = vpack.c.b16 %v583, %v582
  %v587 = vpack.c.b16 %v585, %v584
  %v591 = vsel %vm324, %v559, 0
  %v594 = vsel %vm324, %v560, 0
  %v597 = vsel %vm324, %v561, 0
  %v600 = vsel %vm324, %v562, 0
  %v603 = vsel %vm324, %v563, 0
  %v606 = vsel %vm324, %v564, 0
  %v609 = vsel %vm324, %v565, 0
  %v612 = vsel %vm324, %v566, 0
  %614 = vmatprep.subr.bf16.mxu0 0
  %615 = vmatpush1.bf16.msra.mxu0 %v586
  %616 = vmatprep.subr.bf16.mxu0 0
  %617 = vmatpush1.bf16.msra.mxu0 %v587
  %618 = vmatprep.subr.bf16.mxu0 0
  %619 = vmatpush1.bf16.msra.mxu0 0
  %620 = vmatprep.subr.bf16.mxu0 0
  %621 = vmatpush1.bf16.msra.mxu0 0
  %622 = vmatprep.subr.bf16.mxu0 0
  %623 = vmatpush1.bf16.msra.mxu0 0
  %624 = vmatprep.subr.bf16.mxu0 0
  %625 = vmatpush1.bf16.msra.mxu0 0
  %626 = vmatprep.subr.bf16.mxu0 0
  %627 = vmatpush1.bf16.msra.mxu0 0
  %628 = vmatprep.subr.bf16.mxu0 0
  %629 = vmatpush1.bf16.msra.mxu0 0
  %630 = vmatprep.subr.bf16.mxu0 0
  %631 = vmatpush1.bf16.msra.mxu0 0
  %632 = vmatprep.subr.bf16.mxu0 0
  %633 = vmatpush1.bf16.msra.mxu0 0
  %634 = vmatprep.subr.bf16.mxu0 0
  %635 = vmatpush1.bf16.msra.mxu0 0
  %636 = vmatprep.subr.bf16.mxu0 0
  %637 = vmatpush1.bf16.msra.mxu0 0
  %638 = vmatprep.subr.bf16.mxu0 0
  %639 = vmatpush1.bf16.msra.mxu0 0
  %640 = vmatprep.subr.bf16.mxu0 0
  %641 = vmatpush1.bf16.msra.mxu0 0
  %642 = vmatprep.subr.bf16.mxu0 0
  %643 = vmatpush1.bf16.msra.mxu0 0
  %644 = vmatprep.subr.bf16.mxu0 0
  %645 = vmatpush1.bf16.msra.mxu0 0
  %646 = vmatprep.mubr.bf16.mxu0 0
  %647 = vmatmul.mubr.bf16.gmra.mrb[0].mxu0 %v591
  %v648 = vpop.f32.mrb[0].mxu0
  %v649 = vadd.f32 %v576, %v648
  %v650 = vpop.f32.mrb[0].mxu0
  %v651 = vpop.f32.mrb[0].mxu0
  %v652 = vadd.f32 %v576, %v651
  %v653 = vpop.f32.mrb[0].mxu0
  %654 = vmatprep.mubr.bf16.mxu0 0
  %655 = vmatmul.mubr.bf16.gmra.mrb[0].mxu0 %v594
  %v656 = vpop.f32.mrb[0].mxu0
  %v657 = vadd.f32 %v576, %v656
  %v658 = vpop.f32.mrb[0].mxu0
  %v659 = vpop.f32.mrb[0].mxu0
  %v660 = vadd.f32 %v576, %v659
  %v661 = vpop.f32.mrb[0].mxu0
  %662 = vmatprep.mubr.bf16.mxu0 0
  %663 = vmatmul.mubr.bf16.gmra.mrb[0].mxu0 %v597
  %v664 = vpop.f32.mrb[0].mxu0
  %v665 = vadd.f32 %v576, %v664
  %v666 = vpop.f32.mrb[0].mxu0
  %v667 = vpop.f32.mrb[0].mxu0
  %v668 = vadd.f32 %v576, %v667
  %v669 = vpop.f32.mrb[0].mxu0
  %670 = vmatprep.mubr.bf16.mxu0 0
  %671 = vmatmul.mubr.bf16.gmra.mrb[0].mxu0 %v600
  %v672 = vpop.f32.mrb[0].mxu0
  %v673 = vadd.f32 %v576, %v672
  %v674 = vpop.f32.mrb[0].mxu0
  %v675 = vpop.f32.mrb[0].mxu0
  %v676 = vadd.f32 %v576, %v675
  %v677 = vpop.f32.mrb[0].mxu0
  %678 = vmatprep.mubr.bf16.mxu0 0
  %679 = vmatmul.mubr.bf16.gmra.mrb[0].mxu0 %v603
  %v680 = vpop.f32.mrb[0].mxu0
  %v681 = vadd.f32 %v576, %v680
  %v682 = vpop.f32.mrb[0].mxu0
  %v683 = vpop.f32.mrb[0].mxu0
  %v684 = vadd.f32 %v576, %v683
  %v685 = vpop.f32.mrb[0].mxu0
  %686 = vmatprep.mubr.bf16.mxu0 0
  %687 = vmatmul.mubr.bf16.gmra.mrb[0].mxu0 %v606
  %v688 = vpop.f32.mrb[0].mxu0
  %v689 = vadd.f32 %v576, %v688
  %v690 = vpop.f32.mrb[0].mxu0
  %v691 = vpop.f32.mrb[0].mxu0
  %v692 = vadd.f32 %v576, %v691
  %v693 = vpop.f32.mrb[0].mxu0
  %694 = vmatprep.mubr.bf16.mxu0 0
  %695 = vmatmul.mubr.bf16.gmra.mrb[0].mxu0 %v609
  %v696 = vpop.f32.mrb[0].mxu0
  %v697 = vadd.f32 %v576, %v696
  %v698 = vpop.f32.mrb[0].mxu0
  %v699 = vpop.f32.mrb[0].mxu0
  %v700 = vadd.f32 %v576, %v699
  %v701 = vpop.f32.mrb[0].mxu0
  %702 = vmatprep.mubr.bf16.mxu0 0
  %703 = vmatmul.mubr.bf16.gmra.mrb[0].mxu0 %v612
  %v704 = vpop.f32.mrb[0].mxu0
  %v705 = vadd.f32 %v576, %v704
  %v706 = vpop.f32.mrb[0].mxu0
  %v707 = vpop.f32.mrb[0].mxu0
  %v708 = vadd.f32 %v576, %v707
  %v709 = vpop.f32.mrb[0].mxu0
  %710 = vdwg.mxu0
  %711 = vst [vmem:[%s5] sm:$0xff] %v649
  %712 = vst [vmem:[%s5 + $0x8] sm:$0xff] %v652
  %713 = vst [vmem:[%s5 + $0x10] sm:$0xff] %v657
  %714 = vst [vmem:[%s5 + $0x18] sm:$0xff] %v660
  %715 = vst [vmem:[%s5 + $0x20] sm:$0xff] %v665
  %716 = vst [vmem:[%s5 + $0x28] sm:$0xff] %v668
  %717 = vst [vmem:[%s5 + $0x30] sm:$0xff] %v673
  %718 = vst [vmem:[%s5 + $0x38] sm:$0xff] %v676
  %719 = vst [vmem:[%s5 + $0x40] sm:$0xff] %v681
  %720 = vst [vmem:[%s5 + $0x48] sm:$0xff] %v684
  %721 = vst [vmem:[%s5 + $0x50] sm:$0xff] %v689
  %722 = vst [vmem:[%s5 + $0x58] sm:$0xff] %v692
  %723 = vst [vmem:[%s5 + $0x60] sm:$0xff] %v697
  %724 = vst [vmem:[%s5 + $0x68] sm:$0xff] %v700
  %725 = vst [vmem:[%s5 + $0x70] sm:$0xff] %v705
  %726 = vst [vmem:[%s5 + $0x78] sm:$0xff] %v708
  // Predicated region
  $region22: #{_rpn_compute.1} parent=0 // pred_check
    _
  $region23: #{_rpn_compute.1} parent=0 // pred_check_branch
    %728 = sbr.rel (0) target = $region25
  $region24: #{_rpn_compute.1} parent=0 // pred_region
    _
  $region25: #{_rpn_compute.1} parent=0 // pred_fallthru
    _
  // Predicated region
  $region26: #{_rpn_compute.1} parent=0 // pred_check
    _
  $region27: #{_rpn_compute.1} parent=0 // pred_check_branch
    %730 = sbr.rel (0) target = $region29
  $region28: #{_rpn_compute.1} parent=0 // pred_region
    _
  $region29: #{_rpn_compute.1} parent=0 // pred_fallthru
    _

// kernel: squeeze.1
$region0: #{squeeze.1}
  %s0 = inlined_call_operand.vmem [shape: f32[2,8,8,9,1], index: 0, kind: input, shape index: {}]
  %s1 = inlined_call_operand.hbm [shape: f32[2,576], index: 1, kind: output, shape index: {}]
  $region1: #{squeeze.1} parent=0
    #allocation0 [shape = 'u8[5120]{0}', space=vmem, size = 0x1400, scoped, tag = 'operand span for operand 1']
    #allocation1 [shape = 's32[1]{0}', space=sflag, size = 0x4, scoped, tag = 'scoped memory for squeeze.1']
    #allocation2 [shape = 'u8[20480]{0}', space=vmem, size = 0x5000, scoped, tag = 'scoped mem for output reshape']
    %2 = vsyncpa [#allocation1], 0
    %v3 = vld [vmem:[%s0] sm:$0x1]
    %s4 = scalar_lea.vmem %s0, 63
    %v5 = vld [vmem:[%s4] sm:$0x2]
    %vm6 = vcmask 1041409
    %v7 = vsel %vm6, %v5, %v3
    %vm8 = vcmask 72704
    %9 = vst.msk [vmem:[#allocation2] sm:$0x3] %vm8, %v7
    %s10 = scalar_lea.vmem %s0, 14
    %v11 = vld [vmem:[%s10] sm:$0x1]
    %s12 = scalar_lea.vmem %s0, 77
    %v13 = vld [vmem:[%s12] sm:$0x2]
    %vm14 = vcmask 1041409
    %v15 = vsel %vm14, %v13, %v11
    %s16 = scalar_lea.vmem %s0, 14
    %v17 = vld [vmem:[%s16] sm:$0x1]
    %s18 = scalar_lea.vmem %s0, 77
    %v19 = vld [vmem:[%s18] sm:$0x2]
    %vm20 = vcmask 1041409
    %v21 = vsel %vm20, %v19, %v17
    %vm22 = vcmask 15360
    %v23 = vsel %vm22, %v21, %v15
    %24 = vrot.lane.b32.xlu0 %v23, 126
    %v25 = vpop.permute.xlu0 %24
    %vm26 = vcmask 56320
    %s27 = scalar_lea.vmem [#allocation2], 8
    %28 = vst.msk [vmem:[%s27] sm:$0x3] %vm26, %v25
    %vm29 = vcmask 1048560
    %30 = vst.msk [vmem:[#allocation2] sm:$0x3] %vm29, %v25
    %s31 = scalar_lea.vmem %s0, 28
    %v32 = vld [vmem:[%s31] sm:$0x1]
    %s33 = scalar_lea.vmem %s0, 91
    %v34 = vld [vmem:[%s33] sm:$0x2]
    %vm35 = vcmask 1041409
    %v36 = vsel %vm35, %v34, %v32
    %s37 = scalar_lea.vmem %s0, 28
    %v38 = vld [vmem:[%s37] sm:$0x1]
    %s39 = scalar_lea.vmem %s0, 91
    %v40 = vld [vmem:[%s39] sm:$0x2]
    %vm41 = vcmask 1041409
    %v42 = vsel %vm41, %v40, %v38
    %vm43 = vcmask 31744
    %v44 = vsel %vm43, %v42, %v36
    %45 = vrot.lane.b32.xlu0 %v44, 124
    %v46 = vpop.permute.xlu0 %45
    %vm47 = vcmask 39936
    %s48 = scalar_lea.vmem [#allocation2], 16
    %49 = vst.msk [vmem:[%s48] sm:$0x3] %vm47, %v46
    %vm50 = vcmask 1048544
    %s51 = scalar_lea.vmem [#allocation2], 8
    %52 = vst.msk [vmem:[%s51] sm:$0x3] %vm50, %v46
    %s53 = scalar_lea.vmem %s0, 42
    %v54 = vld [vmem:[%s53] sm:$0x1]
    %s55 = scalar_lea.vmem %s0, 105
    %v56 = vld [vmem:[%s55] sm:$0x2]
    %vm57 = vcmask 1041409
    %v58 = vsel %vm57, %v56, %v54
    %s59 = scalar_lea.vmem %s0, 42
    %v60 = vld [vmem:[%s59] sm:$0x1]
    %s61 = scalar_lea.vmem %s0, 105
    %v62 = vld [vmem:[%s61] sm:$0x2]
    %vm63 = vcmask 1041409
    %v64 = vsel %vm63, %v62, %v60
    %vm65 = vcmask 48128
    %v66 = vsel %vm65, %v64, %v58
    %67 = vrot.lane.b32.xlu0 %v66, 122
    %v68 = vpop.permute.xlu0 %67
    %vm69 = vcmask 23552
    %s70 = scalar_lea.vmem [#allocation2], 24
    %71 = vst.msk [vmem:[%s70] sm:$0x3] %vm69, %v68
    %vm72 = vcmask 1048528
    %s73 = scalar_lea.vmem [#allocation2], 16
    %74 = vst.msk [vmem:[%s73] sm:$0x3] %vm72, %v68
    %s75 = scalar_lea.vmem %s0, 56
    %v76 = vld [vmem:[%s75] sm:$0x1]
    %s77 = scalar_lea.vmem %s0, 119
    %v78 = vld [vmem:[%s77] sm:$0x2]
    %vm79 = vcmask 1041409
    %v80 = vsel %vm79, %v78, %v76
    %s81 = scalar_lea.vmem %s0, 56
    %v82 = vld [vmem:[%s81] sm:$0x1]
    %s83 = scalar_lea.vmem %s0, 119
    %v84 = vld [vmem:[%s83] sm:$0x2]
    %vm85 = vcmask 1041409
    %v86 = vsel %vm85, %v84, %v82
    %vm87 = vcmask 64512
    %v88 = vsel %vm87, %v86, %v80
    %89 = vrot.lane.b32.xlu0 %v88, 120
    %v90 = vpop.permute.xlu0 %89
    %vm91 = vcmask 7168
    %s92 = scalar_lea.vmem [#allocation2], 32
    %93 = vst.msk [vmem:[%s92] sm:$0x3] %vm91, %v90
    %vm94 = vcmask 1048512
    %s95 = scalar_lea.vmem [#allocation2], 24
    %96 = vst.msk [vmem:[%s95] sm:$0x3] %vm94, %v90
    %s97 = scalar_lea.vmem %s0, 13
    %v98 = vld [vmem:[%s97] sm:$0x1]
    %s99 = scalar_lea.vmem %s0, 76
    %v100 = vld [vmem:[%s99] sm:$0x2]
    %vm101 = vcmask 1041409
    %v102 = vsel %vm101, %v100, %v98
    %103 = vrot.lane.b32.xlu0 %v102, 117
    %v104 = vpop.permute.xlu0 %103
    %vm105 = vcmask 1032104
    %106 = vst.msk [vmem:[#allocation2] sm:$0x3] %vm105, %v104
    %s107 = scalar_lea.vmem %s0, 27
    %v108 = vld [vmem:[%s107] sm:$0x1]
    %s109 = scalar_lea.vmem %s0, 90
    %v110 = vld [vmem:[%s109] sm:$0x2]
    %vm111 = vcmask 1041409
    %v112 = vsel %vm111, %v110, %v108
    %113 = vrot.lane.b32.xlu0 %v112, 115
    %v114 = vpop.permute.xlu0 %113
    %vm115 = vcmask 1015704
    %s116 = scalar_lea.vmem [#allocation2], 8
    %117 = vst.msk [vmem:[%s116] sm:$0x3] %vm115, %v114
    %s118 = scalar_lea.vmem %s0, 41
    %v119 = vld [vmem:[%s118] sm:$0x1]
    %s120 = scalar_lea.vmem %s0, 104
    %v121 = vld [vmem:[%s120] sm:$0x2]
    %vm122 = vcmask 1041409
    %v123 = vsel %vm122, %v121, %v119
    %124 = vrot.lane.b32.xlu0 %v123, 113
    %v125 = vpop.permute.xlu0 %124
    %vm126 = vcmask 999304
    %s127 = scalar_lea.vmem [#allocation2], 16
    %128 = vst.msk [vmem:[%s127] sm:$0x3] %vm126, %v125
    %s129 = scalar_lea.vmem %s0, 55
    %v130 = vld [vmem:[%s129] sm:$0x1]
    %s131 = scalar_lea.vmem %s0, 118
    %v132 = vld [vmem:[%s131] sm:$0x2]
    %vm133 = vcmask 1041409
    %v134 = vsel %vm133, %v132, %v130
    %135 = vrot.lane.b32.xlu0 %v134, 111
    %v136 = vpop.permute.xlu0 %135
    %vm137 = vcmask 982904
    %s138 = scalar_lea.vmem [#allocation2], 24
    %139 = vst.msk [vmem:[%s138] sm:$0x3] %vm137, %v136
    %s140 = scalar_lea.vmem %s0, 12
    %v141 = vld [vmem:[%s140] sm:$0x1]
    %s142 = scalar_lea.vmem %s0, 75
    %v143 = vld [vmem:[%s142] sm:$0x2]
    %vm144 = vcmask 1041409
    %v145 = vsel %vm144, %v143, %v141
    %146 = vrot.lane.b32.xlu0 %v145, 108
    %v147 = vpop.permute.xlu0 %146
    %vm148 = vcmask 958304
    %149 = vst.msk [vmem:[#allocation2] sm:$0x3] %vm148, %v147
    %s150 = scalar_lea.vmem %s0, 26
    %v151 = vld [vmem:[%s150] sm:$0x1]
    %s152 = scalar_lea.vmem %s0, 89
    %v153 = vld [vmem:[%s152] sm:$0x2]
    %vm154 = vcmask 1041409
    %v155 = vsel %vm154, %v153, %v151
    %156 = vrot.lane.b32.xlu0 %v155, 106
    %v157 = vpop.permute.xlu0 %156
    %vm158 = vcmask 941904
    %s159 = scalar_lea.vmem [#allocation2], 8
    %160 = vst.msk [vmem:[%s159] sm:$0x3] %vm158, %v157
    %s161 = scalar_lea.vmem %s0, 40
    %v162 = vld [vmem:[%s161] sm:$0x1]
    %s163 = scalar_lea.vmem %s0, 103
    %v164 = vld [vmem:[%s163] sm:$0x2]
    %vm165 = vcmask 1041409
    %v166 = vsel %vm165, %v164, %v162
    %167 = vrot.lane.b32.xlu0 %v166, 104
    %v168 = vpop.permute.xlu0 %167
    %vm169 = vcmask 925504
    %s170 = scalar_lea.vmem [#allocation2], 16
    %171 = vst.msk [vmem:[%s170] sm:$0x3] %vm169, %v168
    %s172 = scalar_lea.vmem %s0, 54
    %v173 = vld [vmem:[%s172] sm:$0x1]
    %s174 = scalar_lea.vmem %s0, 117
    %v175 = vld [vmem:[%s174] sm:$0x2]
    %vm176 = vcmask 1041409
    %v177 = vsel %vm176, %v175, %v173
    %178 = vrot.lane.b32.xlu0 %v177, 102
    %v179 = vpop.permute.xlu0 %178
    %vm180 = vcmask 909104
    %s181 = scalar_lea.vmem [#allocation2], 24
    %182 = vst.msk [vmem:[%s181] sm:$0x3] %vm180, %v179
    %s183 = scalar_lea.vmem %s0, 11
    %v184 = vld [vmem:[%s183] sm:$0x1]
    %s185 = scalar_lea.vmem %s0, 74
    %v186 = vld [vmem:[%s185] sm:$0x2]
    %vm187 = vcmask 1041409
    %v188 = vsel %vm187, %v186, %v184
    %189 = vrot.lane.b32.xlu0 %v188, 99
    %v190 = vpop.permute.xlu0 %189
    %vm191 = vcmask 884504
    %192 = vst.msk [vmem:[#allocation2] sm:$0x3] %vm191, %v190
    %s193 = scalar_lea.vmem %s0, 25
    %v194 = vld [vmem:[%s193] sm:$0x1]
    %s195 = scalar_lea.vmem %s0, 88
    %v196 = vld [vmem:[%s195] sm:$0x2]
    %vm197 = vcmask 1041409
    %v198 = vsel %vm197, %v196, %v194
    %199 = vrot.lane.b32.xlu0 %v198, 97
    %v200 = vpop.permute.xlu0 %199
    %vm201 = vcmask 868104
    %s202 = scalar_lea.vmem [#allocation2], 8
    %203 = vst.msk [vmem:[%s202] sm:$0x3] %vm201, %v200
    %s204 = scalar_lea.vmem %s0, 39
    %v205 = vld [vmem:[%s204] sm:$0x1]
    %s206 = scalar_lea.vmem %s0, 102
    %v207 = vld [vmem:[%s206] sm:$0x2]
    %vm208 = vcmask 1041409
    %v209 = vsel %vm208, %v207, %v205
    %210 = vrot.lane.b32.xlu0 %v209, 95
    %v211 = vpop.permute.xlu0 %210
    %vm212 = vcmask 851704
    %s213 = scalar_lea.vmem [#allocation2], 16
    %214 = vst.msk [vmem:[%s213] sm:$0x3] %vm212, %v211
    %s215 = scalar_lea.vmem %s0, 53
    %v216 = vld [vmem:[%s215] sm:$0x1]
    %s217 = scalar_lea.vmem %s0, 116
    %v218 = vld [vmem:[%s217] sm:$0x2]
    %vm219 = vcmask 1041409
    %v220 = vsel %vm219, %v218, %v216
    %221 = vrot.lane.b32.xlu0 %v220, 93
    %v222 = vpop.permute.xlu0 %221
    %vm223 = vcmask 835304
    %s224 = scalar_lea.vmem [#allocation2], 24
    %225 = vst.msk [vmem:[%s224] sm:$0x3] %vm223, %v222
    %s226 = scalar_lea.vmem %s0, 10
    %v227 = vld [vmem:[%s226] sm:$0x1]
    %s228 = scalar_lea.vmem %s0, 73
    %v229 = vld [vmem:[%s228] sm:$0x2]
    %vm230 = vcmask 1041409
    %v231 = vsel %vm230, %v229, %v227
    %232 = vrot.lane.b32.xlu0 %v231, 90
    %v233 = vpop.permute.xlu0 %232
    %vm234 = vcmask 810704
    %235 = vst.msk [vmem:[#allocation2] sm:$0x3] %vm234, %v233
    %s236 = scalar_lea.vmem %s0, 24
    %v237 = vld [vmem:[%s236] sm:$0x1]
    %s238 = scalar_lea.vmem %s0, 87
    %v239 = vld [vmem:[%s238] sm:$0x2]
    %vm240 = vcmask 1041409
    %v241 = vsel %vm240, %v239, %v237
    %242 = vrot.lane.b32.xlu0 %v241, 88
    %v243 = vpop.permute.xlu0 %242
    %vm244 = vcmask 794304
    %s245 = scalar_lea.vmem [#allocation2], 8
    %246 = vst.msk [vmem:[%s245] sm:$0x3] %vm244, %v243
    %s247 = scalar_lea.vmem %s0, 38
    %v248 = vld [vmem:[%s247] sm:$0x1]
    %s249 = scalar_lea.vmem %s0, 101
    %v250 = vld [vmem:[%s249] sm:$0x2]
    %vm251 = vcmask 1041409
    %v252 = vsel %vm251, %v250, %v248
    %253 = vrot.lane.b32.xlu0 %v252, 86
    %v254 = vpop.permute.xlu0 %253
    %vm255 = vcmask 777904
    %s256 = scalar_lea.vmem [#allocation2], 16
    %257 = vst.msk [vmem:[%s256] sm:$0x3] %vm255, %v254
    %s258 = scalar_lea.vmem %s0, 52
    %v259 = vld [vmem:[%s258] sm:$0x1]
    %s260 = scalar_lea.vmem %s0, 115
    %v261 = vld [vmem:[%s260] sm:$0x2]
    %vm262 = vcmask 1041409
    %v263 = vsel %vm262, %v261, %v259
    %264 = vrot.lane.b32.xlu0 %v263, 84
    %v265 = vpop.permute.xlu0 %264
    %vm266 = vcmask 761504
    %s267 = scalar_lea.vmem [#allocation2], 24
    %268 = vst.msk [vmem:[%s267] sm:$0x3] %vm266, %v265
    %s269 = scalar_lea.vmem %s0, 9
    %v270 = vld [vmem:[%s269] sm:$0x1]
    %s271 = scalar_lea.vmem %s0, 72
    %v272 = vld [vmem:[%s271] sm:$0x2]
    %vm273 = vcmask 1041409
    %v274 = vsel %vm273, %v272, %v270
    %275 = vrot.lane.b32.xlu0 %v274, 81
    %v276 = vpop.permute.xlu0 %275
    %vm277 = vcmask 736904
    %278 = vst.msk [vmem:[#allocation2] sm:$0x3] %vm277, %v276
    %s279 = scalar_lea.vmem %s0, 23
    %v280 = vld [vmem:[%s279] sm:$0x1]
    %s281 = scalar_lea.vmem %s0, 86
    %v282 = vld [vmem:[%s281] sm:$0x2]
    %vm283 = vcmask 1041409
    %v284 = vsel %vm283, %v282, %v280
    %285 = vrot.lane.b32.xlu0 %v284, 79
    %v286 = vpop.permute.xlu0 %285
    %vm287 = vcmask 720504
    %s288 = scalar_lea.vmem [#allocation2], 8
    %289 = vst.msk [vmem:[%s288] sm:$0x3] %vm287, %v286
    %s290 = scalar_lea.vmem %s0, 37
    %v291 = vld [vmem:[%s290] sm:$0x1]
    %s292 = scalar_lea.vmem %s0, 100
    %v293 = vld [vmem:[%s292] sm:$0x2]
    %vm294 = vcmask 1041409
    %v295 = vsel %vm294, %v293, %v291
    %296 = vrot.lane.b32.xlu0 %v295, 77
    %v297 = vpop.permute.xlu0 %296
    %vm298 = vcmask 704104
    %s299 = scalar_lea.vmem [#allocation2], 16
    %300 = vst.msk [vmem:[%s299] sm:$0x3] %vm298, %v297
    %s301 = scalar_lea.vmem %s0, 51
    %v302 = vld [vmem:[%s301] sm:$0x1]
    %s303 = scalar_lea.vmem %s0, 114
    %v304 = vld [vmem:[%s303] sm:$0x2]
    %vm305 = vcmask 1041409
    %v306 = vsel %vm305, %v304, %v302
    %307 = vrot.lane.b32.xlu0 %v306, 75
    %v308 = vpop.permute.xlu0 %307
    %vm309 = vcmask 687704
    %s310 = scalar_lea.vmem [#allocation2], 24
    %311 = vst.msk [vmem:[%s310] sm:$0x3] %vm309, %v308
    %s312 = scalar_lea.vmem %s0, 8
    %v313 = vld [vmem:[%s312] sm:$0x1]
    %s314 = scalar_lea.vmem %s0, 71
    %v315 = vld [vmem:[%s314] sm:$0x2]
    %vm316 = vcmask 1041409
    %v317 = vsel %vm316, %v315, %v313
    %318 = vrot.lane.b32.xlu0 %v317, 72
    %v319 = vpop.permute.xlu0 %318
    %vm320 = vcmask 663104
    %321 = vst.msk [vmem:[#allocation2] sm:$0x3] %vm320, %v319
    %s322 = scalar_lea.vmem %s0, 22
    %v323 = vld [vmem:[%s322] sm:$0x1]
    %s324 = scalar_lea.vmem %s0, 85
    %v325 = vld [vmem:[%s324] sm:$0x2]
    %vm326 = vcmask 1041409
    %v327 = vsel %vm326, %v325, %v323
    %328 = vrot.lane.b32.xlu0 %v327, 70
    %v329 = vpop.permute.xlu0 %328
    %vm330 = vcmask 646704
    %s331 = scalar_lea.vmem [#allocation2], 8
    %332 = vst.msk [vmem:[%s331] sm:$0x3] %vm330, %v329
    %s333 = scalar_lea.vmem %s0, 36
    %v334 = vld [vmem:[%s333] sm:$0x1]
    %s335 = scalar_lea.vmem %s0, 99
    %v336 = vld [vmem:[%s335] sm:$0x2]
    %vm337 = vcmask 1041409
    %v338 = vsel %vm337, %v336, %v334
    %339 = vrot.lane.b32.xlu0 %v338, 68
    %v340 = vpop.permute.xlu0 %339
    %vm341 = vcmask 630304
    %s342 = scalar_lea.vmem [#allocation2], 16
    %343 = vst.msk [vmem:[%s342] sm:$0x3] %vm341, %v340
    %s344 = scalar_lea.vmem %s0, 50
    %v345 = vld [vmem:[%s344] sm:$0x1]
    %s346 = scalar_lea.vmem %s0, 113
    %v347 = vld [vmem:[%s346] sm:$0x2]
    %vm348 = vcmask 1041409
    %v349 = vsel %vm348, %v347, %v345
    %350 = vrot.lane.b32.xlu0 %v349, 66
    %v351 = vpop.permute.xlu0 %350
    %vm352 = vcmask 613904
    %s353 = scalar_lea.vmem [#allocation2], 24
    %354 = vst.msk [vmem:[%s353] sm:$0x3] %vm352, %v351
    %s355 = scalar_lea.vmem %s0, 7
    %v356 = vld [vmem:[%s355] sm:$0x1]
    %s357 = scalar_lea.vmem %s0, 70
    %v358 = vld [vmem:[%s357] sm:$0x2]
    %vm359 = vcmask 1041409
    %v360 = vsel %vm359, %v358, %v356
    %361 = vrot.lane.b32.xlu0 %v360, 63
    %v362 = vpop.permute.xlu0 %361
    %vm363 = vcmask 589304
    %364 = vst.msk [vmem:[#allocation2] sm:$0x3] %vm363, %v362
    %s365 = scalar_lea.vmem %s0, 21
    %v366 = vld [vmem:[%s365] sm:$0x1]
    %s367 = scalar_lea.vmem %s0, 84
    %v368 = vld [vmem:[%s367] sm:$0x2]
    %vm369 = vcmask 1041409
    %v370 = vsel %vm369, %v368, %v366
    %371 = vrot.lane.b32.xlu0 %v370, 61
    %v372 = vpop.permute.xlu0 %371
    %vm373 = vcmask 572904
    %s374 = scalar_lea.vmem [#allocation2], 8
    %375 = vst.msk [vmem:[%s374] sm:$0x3] %vm373, %v372
    %s376 = scalar_lea.vmem %s0, 35
    %v377 = vld [vmem:[%s376] sm:$0x1]
    %s378 = scalar_lea.vmem %s0, 98
    %v379 = vld [vmem:[%s378] sm:$0x2]
    %vm380 = vcmask 1041409
    %v381 = vsel %vm380, %v379, %v377
    %382 = vrot.lane.b32.xlu0 %v381, 59
    %v383 = vpop.permute.xlu0 %382
    %vm384 = vcmask 556504
    %s385 = scalar_lea.vmem [#allocation2], 16
    %386 = vst.msk [vmem:[%s385] sm:$0x3] %vm384, %v383
    %s387 = scalar_lea.vmem %s0, 49
    %v388 = vld [vmem:[%s387] sm:$0x1]
    %s389 = scalar_lea.vmem %s0, 112
    %v390 = vld [vmem:[%s389] sm:$0x2]
    %vm391 = vcmask 1041409
    %v392 = vsel %vm391, %v390, %v388
    %393 = vrot.lane.b32.xlu0 %v392, 57
    %v394 = vpop.permute.xlu0 %393
    %vm395 = vcmask 540104
    %s396 = scalar_lea.vmem [#allocation2], 24
    %397 = vst.msk [vmem:[%s396] sm:$0x3] %vm395, %v394
    %s398 = scalar_lea.vmem %s0, 63
    %v399 = vld [vmem:[%s398] sm:$0x1]
    %s400 = scalar_lea.vmem %s0, 126
    %v401 = vld [vmem:[%s400] sm:$0x2]
    %vm402 = vcmask 1041409
    %v403 = vsel %vm402, %v401, %v399
    %404 = vrot.lane.b32.xlu0 %v403, 55
    %v405 = vpop.permute.xlu0 %404
    %vm406 = vcmask 523704
    %s407 = scalar_lea.vmem [#allocation2], 32
    %408 = vst.msk [vmem:[%s407] sm:$0x3] %vm406, %v405
    %s409 = scalar_lea.vmem %s0, 6
    %v410 = vld [vmem:[%s409] sm:$0x1]
    %s411 = scalar_lea.vmem %s0, 69
    %v412 = vld [vmem:[%s411] sm:$0x2]
    %vm413 = vcmask 1041409
    %v414 = vsel %vm413, %v412, %v410
    %415 = vrot.lane.b32.xlu0 %v414, 54
    %v416 = vpop.permute.xlu0 %415
    %vm417 = vcmask 515504
    %418 = vst.msk [vmem:[#allocation2] sm:$0x3] %vm417, %v416
    %s419 = scalar_lea.vmem %s0, 20
    %v420 = vld [vmem:[%s419] sm:$0x1]
    %s421 = scalar_lea.vmem %s0, 83
    %v422 = vld [vmem:[%s421] sm:$0x2]
    %vm423 = vcmask 1041409
    %v424 = vsel %vm423, %v422, %v420
    %425 = vrot.lane.b32.xlu0 %v424, 52
    %v426 = vpop.permute.xlu0 %425
    %vm427 = vcmask 499104
    %s428 = scalar_lea.vmem [#allocation2], 8
    %429 = vst.msk [vmem:[%s428] sm:$0x3] %vm427, %v426
    %s430 = scalar_lea.vmem %s0, 34
    %v431 = vld [vmem:[%s430] sm:$0x1]
    %s432 = scalar_lea.vmem %s0, 97
    %v433 = vld [vmem:[%s432] sm:$0x2]
    %vm434 = vcmask 1041409
    %v435 = vsel %vm434, %v433, %v431
    %436 = vrot.lane.b32.xlu0 %v435, 50
    %v437 = vpop.permute.xlu0 %436
    %vm438 = vcmask 482704
    %s439 = scalar_lea.vmem [#allocation2], 16
    %440 = vst.msk [vmem:[%s439] sm:$0x3] %vm438, %v437
    %s441 = scalar_lea.vmem %s0, 48
    %v442 = vld [vmem:[%s441] sm:$0x1]
    %s443 = scalar_lea.vmem %s0, 111
    %v444 = vld [vmem:[%s443] sm:$0x2]
    %vm445 = vcmask 1041409
    %v446 = vsel %vm445, %v444, %v442
    %447 = vrot.lane.b32.xlu0 %v446, 48
    %v448 = vpop.permute.xlu0 %447
    %vm449 = vcmask 466304
    %s450 = scalar_lea.vmem [#allocation2], 24
    %451 = vst.msk [vmem:[%s450] sm:$0x3] %vm449, %v448
    %s452 = scalar_lea.vmem %s0, 62
    %v453 = vld [vmem:[%s452] sm:$0x1]
    %s454 = scalar_lea.vmem %s0, 125
    %v455 = vld [vmem:[%s454] sm:$0x2]
    %vm456 = vcmask 1041409
    %v457 = vsel %vm456, %v455, %v453
    %458 = vrot.lane.b32.xlu0 %v457, 46
    %v459 = vpop.permute.xlu0 %458
    %vm460 = vcmask 449904
    %s461 = scalar_lea.vmem [#allocation2], 32
    %462 = vst.msk [vmem:[%s461] sm:$0x3] %vm460, %v459
    %s463 = scalar_lea.vmem %s0, 5
    %v464 = vld [vmem:[%s463] sm:$0x1]
    %s465 = scalar_lea.vmem %s0, 68
    %v466 = vld [vmem:[%s465] sm:$0x2]
    %vm467 = vcmask 1041409
    %v468 = vsel %vm467, %v466, %v464
    %469 = vrot.lane.b32.xlu0 %v468, 45
    %v470 = vpop.permute.xlu0 %469
    %vm471 = vcmask 441704
    %472 = vst.msk [vmem:[#allocation2] sm:$0x3] %vm471, %v470
    %s473 = scalar_lea.vmem %s0, 19
    %v474 = vld [vmem:[%s473] sm:$0x1]
    %s475 = scalar_lea.vmem %s0, 82
    %v476 = vld [vmem:[%s475] sm:$0x2]
    %vm477 = vcmask 1041409
    %v478 = vsel %vm477, %v476, %v474
    %479 = vrot.lane.b32.xlu0 %v478, 43
    %v480 = vpop.permute.xlu0 %479
    %vm481 = vcmask 425304
    %s482 = scalar_lea.vmem [#allocation2], 8
    %483 = vst.msk [vmem:[%s482] sm:$0x3] %vm481, %v480
    %s484 = scalar_lea.vmem %s0, 33
    %v485 = vld [vmem:[%s484] sm:$0x1]
    %s486 = scalar_lea.vmem %s0, 96
    %v487 = vld [vmem:[%s486] sm:$0x2]
    %vm488 = vcmask 1041409
    %v489 = vsel %vm488, %v487, %v485
    %490 = vrot.lane.b32.xlu0 %v489, 41
    %v491 = vpop.permute.xlu0 %490
    %vm492 = vcmask 408904
    %s493 = scalar_lea.vmem [#allocation2], 16
    %494 = vst.msk [vmem:[%s493] sm:$0x3] %vm492, %v491
    %s495 = scalar_lea.vmem %s0, 47
    %v496 = vld [vmem:[%s495] sm:$0x1]
    %s497 = scalar_lea.vmem %s0, 110
    %v498 = vld [vmem:[%s497] sm:$0x2]
    %vm499 = vcmask 1041409
    %v500 = vsel %vm499, %v498, %v496
    %501 = vrot.lane.b32.xlu0 %v500, 39
    %v502 = vpop.permute.xlu0 %501
    %vm503 = vcmask 392504
    %s504 = scalar_lea.vmem [#allocation2], 24
    %505 = vst.msk [vmem:[%s504] sm:$0x3] %vm503, %v502
    %s506 = scalar_lea.vmem %s0, 61
    %v507 = vld [vmem:[%s506] sm:$0x1]
    %s508 = scalar_lea.vmem %s0, 124
    %v509 = vld [vmem:[%s508] sm:$0x2]
    %vm510 = vcmask 1041409
    %v511 = vsel %vm510, %v509, %v507
    %512 = vrot.lane.b32.xlu0 %v511, 37
    %v513 = vpop.permute.xlu0 %512
    %vm514 = vcmask 376104
    %s515 = scalar_lea.vmem [#allocation2], 32
    %516 = vst.msk [vmem:[%s515] sm:$0x3] %vm514, %v513
    %s517 = scalar_lea.vmem %s0, 4
    %v518 = vld [vmem:[%s517] sm:$0x1]
    %s519 = scalar_lea.vmem %s0, 67
    %v520 = vld [vmem:[%s519] sm:$0x2]
    %vm521 = vcmask 1041409
    %v522 = vsel %vm521, %v520, %v518
    %523 = vrot.lane.b32.xlu0 %v522, 36
    %v524 = vpop.permute.xlu0 %523
    %vm525 = vcmask 367904
    %526 = vst.msk [vmem:[#allocation2] sm:$0x3] %vm525, %v524
    %s527 = scalar_lea.vmem %s0, 18
    %v528 = vld [vmem:[%s527] sm:$0x1]
    %s529 = scalar_lea.vmem %s0, 81
    %v530 = vld [vmem:[%s529] sm:$0x2]
    %vm531 = vcmask 1041409
    %v532 = vsel %vm531, %v530, %v528
    %533 = vrot.lane.b32.xlu0 %v532, 34
    %v534 = vpop.permute.xlu0 %533
    %vm535 = vcmask 351504
    %s536 = scalar_lea.vmem [#allocation2], 8
    %537 = vst.msk [vmem:[%s536] sm:$0x3] %vm535, %v534
    %s538 = scalar_lea.vmem %s0, 32
    %v539 = vld [vmem:[%s538] sm:$0x1]
    %s540 = scalar_lea.vmem %s0, 95
    %v541 = vld [vmem:[%s540] sm:$0x2]
    %vm542 = vcmask 1041409
    %v543 = vsel %vm542, %v541, %v539
    %544 = vrot.lane.b32.xlu0 %v543, 32
    %v545 = vpop.permute.xlu0 %544
    %vm546 = vcmask 335104
    %s547 = scalar_lea.vmem [#allocation2], 16
    %548 = vst.msk [vmem:[%s547] sm:$0x3] %vm546, %v545
    %s549 = scalar_lea.vmem %s0, 46
    %v550 = vld [vmem:[%s549] sm:$0x1]
    %s551 = scalar_lea.vmem %s0, 109
    %v552 = vld [vmem:[%s551] sm:$0x2]
    %vm553 = vcmask 1041409
    %v554 = vsel %vm553, %v552, %v550
    %555 = vrot.lane.b32.xlu0 %v554, 30
    %v556 = vpop.permute.xlu0 %555
    %vm557 = vcmask 318704
    %s558 = scalar_lea.vmem [#allocation2], 24
    %559 = vst.msk [vmem:[%s558] sm:$0x3] %vm557, %v556
    %s560 = scalar_lea.vmem %s0, 60
    %v561 = vld [vmem:[%s560] sm:$0x1]
    %s562 = scalar_lea.vmem %s0, 123
    %v563 = vld [vmem:[%s562] sm:$0x2]
    %vm564 = vcmask 1041409
    %v565 = vsel %vm564, %v563, %v561
    %566 = vrot.lane.b32.xlu0 %v565, 28
    %v567 = vpop.permute.xlu0 %566
    %vm568 = vcmask 302304
    %s569 = scalar_lea.vmem [#allocation2], 32
    %570 = vst.msk [vmem:[%s569] sm:$0x3] %vm568, %v567
    %s571 = scalar_lea.vmem %s0, 3
    %v572 = vld [vmem:[%s571] sm:$0x1]
    %s573 = scalar_lea.vmem %s0, 66
    %v574 = vld [vmem:[%s573] sm:$0x2]
    %vm575 = vcmask 1041409
    %v576 = vsel %vm575, %v574, %v572
    %577 = vrot.lane.b32.xlu0 %v576, 27
    %v578 = vpop.permute.xlu0 %577
    %vm579 = vcmask 294104
    %580 = vst.msk [vmem:[#allocation2] sm:$0x3] %vm579, %v578
    %s581 = scalar_lea.vmem %s0, 17
    %v582 = vld [vmem:[%s581] sm:$0x1]
    %s583 = scalar_lea.vmem %s0, 80
    %v584 = vld [vmem:[%s583] sm:$0x2]
    %vm585 = vcmask 1041409
    %v586 = vsel %vm585, %v584, %v582
    %587 = vrot.lane.b32.xlu0 %v586, 25
    %v588 = vpop.permute.xlu0 %587
    %vm589 = vcmask 277704
    %s590 = scalar_lea.vmem [#allocation2], 8
    %591 = vst.msk [vmem:[%s590] sm:$0x3] %vm589, %v588
    %s592 = scalar_lea.vmem %s0, 31
    %v593 = vld [vmem:[%s592] sm:$0x1]
    %s594 = scalar_lea.vmem %s0, 94
    %v595 = vld [vmem:[%s594] sm:$0x2]
    %vm596 = vcmask 1041409
    %v597 = vsel %vm596, %v595, %v593
    %598 = vrot.lane.b32.xlu0 %v597, 23
    %v599 = vpop.permute.xlu0 %598
    %vm600 = vcmask 261304
    %s601 = scalar_lea.vmem [#allocation2], 16
    %602 = vst.msk [vmem:[%s601] sm:$0x3] %vm600, %v599
    %s603 = scalar_lea.vmem %s0, 45
    %v604 = vld [vmem:[%s603] sm:$0x1]
    %s605 = scalar_lea.vmem %s0, 108
    %v606 = vld [vmem:[%s605] sm:$0x2]
    %vm607 = vcmask 1041409
    %v608 = vsel %vm607, %v606, %v604
    %609 = vrot.lane.b32.xlu0 %v608, 21
    %v610 = vpop.permute.xlu0 %609
    %vm611 = vcmask 244904
    %s612 = scalar_lea.vmem [#allocation2], 24
    %613 = vst.msk [vmem:[%s612] sm:$0x3] %vm611, %v610
    %s614 = scalar_lea.vmem %s0, 59
    %v615 = vld [vmem:[%s614] sm:$0x1]
    %s616 = scalar_lea.vmem %s0, 122
    %v617 = vld [vmem:[%s616] sm:$0x2]
    %vm618 = vcmask 1041409
    %v619 = vsel %vm618, %v617, %v615
    %620 = vrot.lane.b32.xlu0 %v619, 19
    %v621 = vpop.permute.xlu0 %620
    %vm622 = vcmask 228504
    %s623 = scalar_lea.vmem [#allocation2], 32
    %624 = vst.msk [vmem:[%s623] sm:$0x3] %vm622, %v621
    %s625 = scalar_lea.vmem %s0, 2
    %v626 = vld [vmem:[%s625] sm:$0x1]
    %s627 = scalar_lea.vmem %s0, 65
    %v628 = vld [vmem:[%s627] sm:$0x2]
    %vm629 = vcmask 1041409
    %v630 = vsel %vm629, %v628, %v626
    %631 = vrot.lane.b32.xlu0 %v630, 18
    %v632 = vpop.permute.xlu0 %631
    %vm633 = vcmask 220304
    %634 = vst.msk [vmem:[#allocation2] sm:$0x3] %vm633, %v632
    %s635 = scalar_lea.vmem %s0, 16
    %v636 = vld [vmem:[%s635] sm:$0x1]
    %s637 = scalar_lea.vmem %s0, 79
    %v638 = vld [vmem:[%s637] sm:$0x2]
    %vm639 = vcmask 1041409
    %v640 = vsel %vm639, %v638, %v636
    %641 = vrot.lane.b32.xlu0 %v640, 16
    %v642 = vpop.permute.xlu0 %641
    %vm643 = vcmask 203904
    %s644 = scalar_lea.vmem [#allocation2], 8
    %645 = vst.msk [vmem:[%s644] sm:$0x3] %vm643, %v642
    %s646 = scalar_lea.vmem %s0, 30
    %v647 = vld [vmem:[%s646] sm:$0x1]
    %s648 = scalar_lea.vmem %s0, 93
    %v649 = vld [vmem:[%s648] sm:$0x2]
    %vm650 = vcmask 1041409
    %v651 = vsel %vm650, %v649, %v647
    %652 = vrot.lane.b32.xlu0 %v651, 14
    %v653 = vpop.permute.xlu0 %652
    %vm654 = vcmask 187504
    %s655 = scalar_lea.vmem [#allocation2], 16
    %656 = vst.msk [vmem:[%s655] sm:$0x3] %vm654, %v653
    %s657 = scalar_lea.vmem %s0, 44
    %v658 = vld [vmem:[%s657] sm:$0x1]
    %s659 = scalar_lea.vmem %s0, 107
    %v660 = vld [vmem:[%s659] sm:$0x2]
    %vm661 = vcmask 1041409
    %v662 = vsel %vm661, %v660, %v658
    %663 = vrot.lane.b32.xlu0 %v662, 12
    %v664 = vpop.permute.xlu0 %663
    %vm665 = vcmask 171104
    %s666 = scalar_lea.vmem [#allocation2], 24
    %667 = vst.msk [vmem:[%s666] sm:$0x3] %vm665, %v664
    %s668 = scalar_lea.vmem %s0, 58
    %v669 = vld [vmem:[%s668] sm:$0x1]
    %s670 = scalar_lea.vmem %s0, 121
    %v671 = vld [vmem:[%s670] sm:$0x2]
    %vm672 = vcmask 1041409
    %v673 = vsel %vm672, %v671, %v669
    %674 = vrot.lane.b32.xlu0 %v673, 10
    %v675 = vpop.permute.xlu0 %674
    %vm676 = vcmask 154704
    %s677 = scalar_lea.vmem [#allocation2], 32
    %678 = vst.msk [vmem:[%s677] sm:$0x3] %vm676, %v675
    %s679 = scalar_lea.vmem %s0, 1
    %v680 = vld [vmem:[%s679] sm:$0x1]
    %s681 = scalar_lea.vmem %s0, 64
    %v682 = vld [vmem:[%s681] sm:$0x2]
    %vm683 = vcmask 1041409
    %v684 = vsel %vm683, %v682, %v680
    %685 = vrot.lane.b32.xlu0 %v684, 9
    %v686 = vpop.permute.xlu0 %685
    %vm687 = vcmask 146504
    %688 = vst.msk [vmem:[#allocation2] sm:$0x3] %vm687, %v686
    %s689 = scalar_lea.vmem %s0, 15
    %v690 = vld [vmem:[%s689] sm:$0x1]
    %s691 = scalar_lea.vmem %s0, 78
    %v692 = vld [vmem:[%s691] sm:$0x2]
    %vm693 = vcmask 1041409
    %v694 = vsel %vm693, %v692, %v690
    %695 = vrot.lane.b32.xlu0 %v694, 7
    %v696 = vpop.permute.xlu0 %695
    %vm697 = vcmask 130104
    %s698 = scalar_lea.vmem [#allocation2], 8
    %699 = vst.msk [vmem:[%s698] sm:$0x3] %vm697, %v696
    %s700 = scalar_lea.vmem %s0, 29
    %v701 = vld [vmem:[%s700] sm:$0x1]
    %s702 = scalar_lea.vmem %s0, 92
    %v703 = vld [vmem:[%s702] sm:$0x2]
    %vm704 = vcmask 1041409
    %v705 = vsel %vm704, %v703, %v701
    %706 = vrot.lane.b32.xlu0 %v705, 5
    %v707 = vpop.permute.xlu0 %706
    %vm708 = vcmask 113704
    %s709 = scalar_lea.vmem [#allocation2], 16
    %710 = vst.msk [vmem:[%s709] sm:$0x3] %vm708, %v707
    %s711 = scalar_lea.vmem %s0, 43
    %v712 = vld [vmem:[%s711] sm:$0x1]
    %s713 = scalar_lea.vmem %s0, 106
    %v714 = vld [vmem:[%s713] sm:$0x2]
    %vm715 = vcmask 1041409
    %v716 = vsel %vm715, %v714, %v712
    %717 = vrot.lane.b32.xlu0 %v716, 3
    %v718 = vpop.permute.xlu0 %717
    %vm719 = vcmask 97304
    %s720 = scalar_lea.vmem [#allocation2], 24
    %721 = vst.msk [vmem:[%s720] sm:$0x3] %vm719, %v718
    %s722 = scalar_lea.vmem %s0, 57
    %v723 = vld [vmem:[%s722] sm:$0x1]
    %s724 = scalar_lea.vmem %s0, 120
    %v725 = vld [vmem:[%s724] sm:$0x2]
    %vm726 = vcmask 1041409
    %v727 = vsel %vm726, %v725, %v723
    %728 = vrot.lane.b32.xlu0 %v727, 1
    %v729 = vpop.permute.xlu0 %728
    %vm730 = vcmask 80904
    %s731 = scalar_lea.vmem [#allocation2], 32
    %732 = vst.msk [vmem:[%s731] sm:$0x3] %vm730, %v729
    %s734 = sshllo.u32 0, 2
    %v736 = vld [vmem:[#allocation2] sm:%s734]
    %s737 = sshllo.u32 0, 2
    %738 = vst [vmem:[#allocation0] sm:%s737] %v736
    %s739 = scalar_lea.vmem [#allocation2], 8
    %v740 = vld [vmem:[%s739] sm:%s734]
    %s741 = sshllo.u32 0, 2
    %s742 = scalar_lea.vmem [#allocation0], 2
    %743 = vst [vmem:[%s742] sm:%s741] %v740
    %s744 = scalar_lea.vmem [#allocation2], 16
    %v745 = vld [vmem:[%s744] sm:%s734]
    %s746 = sshllo.u32 0, 2
    %s747 = smul.addr 2, 2
    %s748 = scalar_lea.vmem [#allocation0], %s747
    %749 = vst [vmem:[%s748] sm:%s746] %v745
    %s750 = scalar_lea.vmem [#allocation2], 24
    %v751 = vld [vmem:[%s750] sm:%s734]
    %s752 = sshllo.u32 0, 2
    %s753 = smul.addr 2, 3
    %s754 = scalar_lea.vmem [#allocation0], %s753
    %755 = vst [vmem:[%s754] sm:%s752] %v751
    %s756 = scalar_lea.vmem [#allocation2], 32
    %v757 = vld [vmem:[%s756] sm:%s734]
    %s758 = sshllo.u32 0, 2
    %s759 = smul.addr 2, 4
    %s760 = scalar_lea.vmem [#allocation0], %s759
    %761 = vst [vmem:[%s760] sm:%s758] %v757
    %s763 = ssub.s32 160, 160
    %764 = vsyncadd [#allocation1], %s763
    %s766 = sshll.u32 [#allocation0], 4
    %s767 = int_to_ptr.vmem [resolvable:$true] %s766
    %769 = dma.vmem_to_hbm [thread:$0]  %s767, 160, %s1, [#allocation1]
    %770 = dma.done [#allocation1], 160
    %771 = vsyncpa [#allocation1], 1

</llo_original>
